<compile_context>
chip_gen: v7x
topology: tpu7x:2x2x1
jax: 0.10.0
libtpu: 0.0.40
codegen_flags: <defaults>
</compile_context>

<pallas_src>
import functools

import jax
import jax.numpy as jnp
from jax import lax
from jax.experimental import pallas as pl
from jax.experimental.pallas import tpu as pltpu

EPS = 1e-5                  # nn.LayerNorm default eps
MXU_DTYPE = jnp.bfloat16    # MXU operand dtype (accumulation stays f32)


def _round_up(x, m):
    return (x + m - 1) // m * m


def _tap_stack(a, mask_ref, *, W, L):
    """Nine rolled+masked tap copies of `a` (C, L) for a 3x3 'same' conv.

    Tap k = ky*3 + kx, (dy, dx) = (ky-1, kx-1); rolled[p] = a[p + dy*W + dx].
    The precomputed boundary mask zeroes positions whose source pixel falls
    outside the image; this also neutralises any roll wrap across sample
    boundaries when several samples are concatenated on the lane axis.
    """
    taps = []
    for k in range(9):
        dy, dx = k // 3 - 1, k % 3 - 1
        if dy == 0 and dx == 0:
            taps.append(a)                       # centre tap: mask is all-ones
        else:
            shift = (-(dy * W + dx)) % L         # static per tap
            taps.append(pltpu.roll(a, shift=shift, axis=1) * mask_ref[k])
    return taps


def unet_block_kernel(x_ref, g_ref, bln_ref, mask_in_ref, mask_h_ref,
                      w1_ref, b1_ref, w2r_ref, b2r_ref, o_ref,
                      *, W, ln_count):
    """One grid step = `Bn` whole samples (channels on sublanes, H*W on lanes).

    x_ref        : (Bn, Cin_p, HW) f32   channel-padded input (pad rows are 0)
    g_ref/bln_ref: (Cin_p, HW)     f32   LayerNorm affine (pad rows are 0)
    mask_in_ref  : (9, Cin_p, Bn*HW)  f32 boundary masks for conv1 taps
    mask_h_ref   : (9, Cout_p, Bn*HW) f32 boundary masks for conv2 taps
    w1_ref       : (Cout_p, 9*Cin_p)  bf16 im2col-packed conv1 weights
    b1_ref       : (Cout_p, 1)        f32
    w2r_ref      : (Cout_p, 9*Cout_p + Cin_p) bf16 conv2 weights ++ residual 1x1
    b2r_ref      : (Cout_p, 1)        f32  conv2 bias + residual bias
    o_ref        : (Bn, Cout_p, HW)   f32
    """
    Bn, _, HW = x_ref.shape
    L = Bn * HW
    inv_cnt = 1.0 / float(ln_count)              # 1 / (Cin * H * W), real count

    # Per-sample LayerNorm over the full (C, H, W) slab, single-pass statistics.
    # (Correct because each block covers whole samples; padded channel rows are
    # zero and gamma/beta padding is zero, so padding drops out.)
    g = g_ref[...]
    bl = bln_ref[...]
    xs, xns = [], []
    for b in range(Bn):                          # static unroll, Bn is small
        xb = x_ref[b]                            # (Cin_p, HW) f32
        s1 = jnp.sum(xb)
        s2 = jnp.sum(xb * xb)
        mean = s1 * inv_cnt
        var = s2 * inv_cnt - mean * mean
        xs.append(xb)
        xns.append((xb - mean) * lax.rsqrt(var + EPS) * g + bl)
    x_all = xs[0] if Bn == 1 else jnp.concatenate(xs, axis=1)      # (Cin_p, L)
    xn_all = xns[0] if Bn == 1 else jnp.concatenate(xns, axis=1)   # (Cin_p, L)

    # conv1 + ReLU: ONE MXU call, K = 9*Cin_p (im2col on the input).
    rhs1 = jnp.concatenate(_tap_stack(xn_all, mask_in_ref, W=W, L=L),
                           axis=0).astype(MXU_DTYPE)               # (9*Cin_p, L)
    h = jnp.dot(w1_ref[...], rhs1, preferred_element_type=jnp.float32)
    h = jnp.maximum(h + b1_ref[...], 0.0)                          # (Cout_p, L)

    # conv2 + residual 1x1 fused into ONE MXU call:
    #   rhs2 = [h taps (9*Cout_p rows) ; original x (Cin_p rows)].
    rhs2 = jnp.concatenate(_tap_stack(h, mask_h_ref, W=W, L=L) + [x_all],
                           axis=0).astype(MXU_DTYPE)    # (9*Cout_p + Cin_p, L)
    out = jnp.dot(w2r_ref[...], rhs2, preferred_element_type=jnp.float32)
    out = jnp.maximum(out + b2r_ref[...], 0.0)                     # (Cout_p, L)

    if Bn == 1:
        o_ref[0] = out
    else:
        for b in range(Bn):
            o_ref[b] = out[:, b * HW:(b + 1) * HW]


def pick_samples_per_step(n_samples, max_per_step=8):
    """Batch samples per grid step to amortize the ~0.35us/step overhead while
    keeping >= 2 parallel grid steps so both v7x TensorCores get work."""
    target = max(1, min(max_per_step, n_samples // 2))
    for bn in range(target, 0, -1):
        if n_samples % bn == 0:
            return bn
    return 1


def prepare_unet_block(params, H, W, samples_per_step=1):
    """Hoisted packing — call once at parameter-load time, not per forward."""
    Cout, Cin, KH, KW = params["conv1_w"].shape
    assert (KH, KW) == (3, 3)
    HW = H * W
    Bn = samples_per_step
    L = Bn * HW
    Cin_p = _round_up(Cin, 8)      # sublane-align every per-tap row block
    Cout_p = _round_up(Cout, 8)

    # LayerNorm affine, channel-padded with zeros (zero gamma/beta also zeroes
    # the padded rows of the normalized activations).
    gamma = jnp.pad(params["ln_w"].reshape(Cin, HW).astype(jnp.float32),
                    ((0, Cin_p - Cin), (0, 0)))
    beta = jnp.pad(params["ln_b"].reshape(Cin, HW).astype(jnp.float32),
                   ((0, Cin_p - Cin), (0, 0)))

    # conv1 weights packed for im2col: column (k*Cin_p + ci) of row co holds
    # conv1_w[co, ci, ky, kx] with k = ky*3 + kx; padded rows/cols are zero.
    w1 = jnp.transpose(params["conv1_w"], (0, 2, 3, 1)).reshape(Cout, 9, Cin)
    w1 = jnp.pad(w1, ((0, Cout_p - Cout), (0, 0), (0, Cin_p - Cin)))
    w1 = w1.reshape(Cout_p, 9 * Cin_p).astype(MXU_DTYPE)

    # conv2 weights packed the same way, residual 1x1 weights appended as extra
    # contraction columns (so the kernel fuses conv2 + residual in one matmul).
    w2 = jnp.transpose(params["conv2_w"], (0, 2, 3, 1)).reshape(Cout, 9, Cout)
    w2 = jnp.pad(w2, ((0, Cout_p - Cout), (0, 0), (0, Cout_p - Cout)))
    w2 = w2.reshape(Cout_p, 9 * Cout_p)
    wr = jnp.pad(params["res_w"][:, :, 0, 0],
                 ((0, Cout_p - Cout), (0, Cin_p - Cin)))
    w2r = jnp.concatenate([w2, wr], axis=1).astype(MXU_DTYPE)

    b1 = jnp.pad(params["conv1_b"], (0, Cout_p - Cout)
                 ).reshape(Cout_p, 1).astype(jnp.float32)
    b2r = jnp.pad(params["conv2_b"] + params["res_b"], (0, Cout_p - Cout)
                  ).reshape(Cout_p, 1).astype(jnp.float32)

    # 9 boundary-validity masks, pre-broadcast over channel rows and tiled per
    # sample along the lane axis (shared by both convs; they also neutralise
    # roll wrap across samples concatenated on lanes).
    ii, jj = jnp.meshgrid(jnp.arange(H), jnp.arange(W), indexing="ij")
    ms = []
    for ky in range(3):
        for kx in range(3):
            dy, dx = ky - 1, kx - 1
            m = ((ii + dy >= 0) & (ii + dy < H) &
                 (jj + dx >= 0) & (jj + dx < W))
            ms.append(m.reshape(HW))
    m9 = jnp.tile(jnp.stack(ms, axis=0).astype(jnp.float32), (1, Bn))  # (9, L)
    mask_in = jnp.broadcast_to(m9[:, None, :], (9, Cin_p, L))
    mask_h = jnp.broadcast_to(m9[:, None, :], (9, Cout_p, L))

    return dict(gamma=gamma, beta=beta, w1=w1, b1=b1, w2r=w2r, b2r=b2r,
                mask_in=mask_in, mask_h=mask_h,
                Cin=Cin, Cout=Cout, Cin_p=Cin_p, Cout_p=Cout_p,
                H=H, W=W, samples_per_step=Bn)


def unet_block_forward(x_nchw, prep):
    """NCHW in / NCHW out.  All norm/conv compute runs inside one Pallas kernel;
    per-call wrapper work is a pure reshape plus (if needed) a tiny channel pad."""
    N, Cin, H, W = x_nchw.shape
    assert (Cin, H, W) == (prep["Cin"], prep["H"], prep["W"])
    HW = H * W
    Bn = prep["samples_per_step"]
    assert N % Bn == 0, "batch must be divisible by samples_per_step"
    Cin_p, Cout, Cout_p = prep["Cin_p"], prep["Cout"], prep["Cout_p"]
    L = Bn * HW

    # NCHW -> (N, C, HW) is a pure reshape (channels on sublanes, HW on lanes).
    x_flat = x_nchw.reshape(N, Cin, HW).astype(jnp.float32)
    if Cin_p > Cin:
        x_flat = jnp.pad(x_flat, ((0, 0), (0, Cin_p - Cin), (0, 0)))

    # Advisory cost estimate for the XLA scheduler.
    flops = 2 * N * HW * Cout_p * (9 * Cin_p + 9 * Cout_p + Cin_p)
    bytes_accessed = (4 * (N * Cin_p * HW + N * Cout_p * HW + 2 * Cin_p * HW
                           + 9 * (Cin_p + Cout_p) * L + 2 * Cout_p)
                      + 2 * (prep["w1"].size + prep["w2r"].size))

    kernel = functools.partial(unet_block_kernel, W=W, ln_count=Cin * HW)

    out_flat = pl.pallas_call(
        kernel,
        out_shape=jax.ShapeDtypeStruct((N, Cout_p, HW), jnp.float32),
        grid_spec=pltpu.PrefetchScalarGridSpec(
            num_scalar_prefetch=0,
            grid=(N // Bn,),
            in_specs=[
                pl.BlockSpec((Bn, Cin_p, HW), lambda n: (n, 0, 0)),
                pl.BlockSpec((Cin_p, HW), lambda n: (0, 0)),
                pl.BlockSpec((Cin_p, HW), lambda n: (0, 0)),
                pl.BlockSpec((9, Cin_p, L), lambda n: (0, 0, 0)),
                pl.BlockSpec((9, Cout_p, L), lambda n: (0, 0, 0)),
                pl.BlockSpec((Cout_p, 9 * Cin_p), lambda n: (0, 0)),
                pl.BlockSpec((Cout_p, 1), lambda n: (0, 0)),
                pl.BlockSpec((Cout_p, 9 * Cout_p + Cin_p), lambda n: (0, 0)),
                pl.BlockSpec((Cout_p, 1), lambda n: (0, 0)),
            ],
            out_specs=pl.BlockSpec((Bn, Cout_p, HW), lambda n: (n, 0, 0)),
        ),
        compiler_params=pltpu.CompilerParams(
            dimension_semantics=("parallel",),
            # Explicit scoped-VMEM budget; tiny here, but stated so tile growth
            # at real sizes is sized against 64 MiB (v7x) / 128 MiB (v5e/v6e).
            vmem_limit_bytes=32 * 1024 * 1024),
        cost_estimate=pl.CostEstimate(flops=int(flops),
                                      transcendentals=int(N),
                                      bytes_accessed=int(bytes_accessed)),
    )(x_flat, prep["gamma"], prep["beta"], prep["mask_in"], prep["mask_h"],
      prep["w1"], prep["b1"], prep["w2r"], prep["b2r"])

    out = out_flat[:, :Cout, :] if Cout_p > Cout else out_flat
    return out.reshape(N, Cout, H, W)


def reference_forward(x, params):
    """Pure-JAX (XLA) reference matching the PyTorch forward."""
    dn = ("NCHW", "OIHW", "NCHW")
    mean = jnp.mean(x, axis=(1, 2, 3), keepdims=True)
    var = jnp.mean((x - mean) ** 2, axis=(1, 2, 3), keepdims=True)
    xn = (x - mean) * lax.rsqrt(var + EPS)
    xn = xn * params["ln_w"][None] + params["ln_b"][None]
    h = lax.conv_general_dilated(xn, params["conv1_w"], (1, 1), "SAME",
                                 dimension_numbers=dn,
                                 precision=lax.Precision.HIGHEST)
    h = jnp.maximum(h + params["conv1_b"][None, :, None, None], 0.0)
    h = lax.conv_general_dilated(h, params["conv2_w"], (1, 1), "SAME",
                                 dimension_numbers=dn,
                                 precision=lax.Precision.HIGHEST)
    h = h + params["conv2_b"][None, :, None, None]
    res = lax.conv_general_dilated(x, params["res_w"], (1, 1), "SAME",
                                   dimension_numbers=dn,
                                   precision=lax.Precision.HIGHEST)
    res = res + params["res_b"][None, :, None, None]
    return jnp.maximum(h + res, 0.0)


if __name__ == "__main__":
    # UnetBlock(shape=(Cin, H, W), in_c=Cin, out_c=Cout, residual=True)
    N, Cin, Cout, H, W = 2, 4, 8, 16, 16

    key = jax.random.PRNGKey(0)
    ks = jax.random.split(key, 9)
    params = {
        "ln_w": (1.0 + 0.1 * jax.random.normal(ks[0], (Cin, H, W))).astype(jnp.float32),
        "ln_b": (0.1 * jax.random.normal(ks[1], (Cin, H, W))).astype(jnp.float32),
        "conv1_w": (0.2 * jax.random.normal(ks[2], (Cout, Cin, 3, 3))).astype(jnp.float32),
        "conv1_b": (0.1 * jax.random.normal(ks[3], (Cout,))).astype(jnp.float32),
        "conv2_w": (0.2 * jax.random.normal(ks[4], (Cout, Cout, 3, 3))).astype(jnp.float32),
        "conv2_b": (0.1 * jax.random.normal(ks[5], (Cout,))).astype(jnp.float32),
        "res_w": (0.2 * jax.random.normal(ks[6], (Cout, Cin, 1, 1))).astype(jnp.float32),
        "res_b": (0.1 * jax.random.normal(ks[7], (Cout,))).astype(jnp.float32),
    }
    x = jax.random.normal(ks[8], (N, Cin, H, W), dtype=jnp.float32)

    # Hoisted once (param-load time): weight packing, masks, channel padding.
    prep = prepare_unet_block(params, H, W,
                              samples_per_step=pick_samples_per_step(N))

    out = jax.block_until_ready(unet_block_forward(x, prep))
    ref = reference_forward(x, params)

    assert out.shape == (N, Cout, H, W), out.shape
    # bf16 MXU operands with f32 accumulation => small rounding vs f32 reference.
    max_err = float(jnp.max(jnp.abs(out - ref)))
    if not (max_err < 5e-2):
        raise AssertionError(f"Pallas kernel mismatch vs reference: {max_err}")
    print("KERNEL_OK")
</pallas_src>

<mosaic_0001>
module attributes {stable_mosaic.version = 11 : i64} {
  func.func @unet_block_kernel(%arg0: i32, %arg1: memref<1x8x256xf32, #tpu.memory_space<vmem>>, %arg2: memref<8x256xf32, #tpu.memory_space<vmem>>, %arg3: memref<8x256xf32, #tpu.memory_space<vmem>>, %arg4: memref<9x8x256xf32, #tpu.memory_space<vmem>>, %arg5: memref<9x8x256xf32, #tpu.memory_space<vmem>>, %arg6: memref<8x72xbf16, #tpu.memory_space<vmem>>, %arg7: memref<8x1xf32, #tpu.memory_space<vmem>>, %arg8: memref<8x80xbf16, #tpu.memory_space<vmem>>, %arg9: memref<8x1xf32, #tpu.memory_space<vmem>>, %arg10: memref<1x8x256xf32, #tpu.memory_space<vmem>>) attributes {dimension_semantics = [#tpu.dimension_semantics<parallel>], iteration_bounds = array<i64: 2>, scalar_prefetch = 0 : i64, scratch_operands = 0 : i64, tpu.core_type = #tpu.core_type<tc>, window_params = [{transform_indices = @transform_0, window_bounds = array<i64: 1, 8, 256>}, {pipeline_mode = #tpu.pipeline_mode<synchronous>, transform_indices = @transform_1, window_bounds = array<i64: 8, 256>}, {pipeline_mode = #tpu.pipeline_mode<synchronous>, transform_indices = @transform_2, window_bounds = array<i64: 8, 256>}, {pipeline_mode = #tpu.pipeline_mode<synchronous>, transform_indices = @transform_3, window_bounds = array<i64: 9, 8, 256>}, {pipeline_mode = #tpu.pipeline_mode<synchronous>, transform_indices = @transform_4, window_bounds = array<i64: 9, 8, 256>}, {pipeline_mode = #tpu.pipeline_mode<synchronous>, transform_indices = @transform_5, window_bounds = array<i64: 8, 72>}, {pipeline_mode = #tpu.pipeline_mode<synchronous>, transform_indices = @transform_6, window_bounds = array<i64: 8, 1>}, {pipeline_mode = #tpu.pipeline_mode<synchronous>, transform_indices = @transform_7, window_bounds = array<i64: 8, 80>}, {pipeline_mode = #tpu.pipeline_mode<synchronous>, transform_indices = @transform_8, window_bounds = array<i64: 8, 1>}, {transform_indices = @transform_9, window_bounds = array<i64: 1, 8, 256>}]} {
    %c0 = arith.constant 0 : index
    %c0_0 = arith.constant 0 : index
    %0 = vector.load %arg2[%c0, %c0_0] : memref<8x256xf32, #tpu.memory_space<vmem>>, vector<8x256xf32>
    %c0_1 = arith.constant 0 : index
    %c0_2 = arith.constant 0 : index
    %1 = vector.load %arg3[%c0_1, %c0_2] : memref<8x256xf32, #tpu.memory_space<vmem>>, vector<8x256xf32>
    %c0_3 = arith.constant 0 : index
    %c0_4 = arith.constant 0 : index
    %c0_5 = arith.constant 0 : index
    %2 = vector.load %arg1[%c0_3, %c0_4, %c0_5] : memref<1x8x256xf32, #tpu.memory_space<vmem>>, vector<1x8x256xf32>
    %3 = vector.shape_cast %2 : vector<1x8x256xf32> to vector<8x256xf32>
    %4 = vector.shape_cast %3 : vector<8x256xf32> to vector<1x8x256xf32>
    %cst = arith.constant dense<0.000000e+00> : vector<1xf32>
    %5 = vector.multi_reduction <add>, %4, %cst [1, 2] : vector<1x8x256xf32> to vector<1xf32>
    %6 = vector.shape_cast %5 : vector<1xf32> to vector<1x1x1xf32>
    %7 = vector.extract %6[0, 0, 0] : f32 from vector<1x1x1xf32>
    %8 = arith.mulf %3, %3 : vector<8x256xf32>
    %9 = vector.shape_cast %8 : vector<8x256xf32> to vector<1x8x256xf32>
    %cst_6 = arith.constant dense<0.000000e+00> : vector<1xf32>
    %10 = vector.multi_reduction <add>, %9, %cst_6 [1, 2] : vector<1x8x256xf32> to vector<1xf32>
    %11 = vector.shape_cast %10 : vector<1xf32> to vector<1x1x1xf32>
    %12 = vector.extract %11[0, 0, 0] : f32 from vector<1x1x1xf32>
    %cst_7 = arith.constant 9.765625E-4 : f32
    %13 = arith.mulf %7, %cst_7 : f32
    %cst_8 = arith.constant 9.765625E-4 : f32
    %14 = arith.mulf %12, %cst_8 : f32
    %15 = arith.mulf %13, %13 : f32
    %16 = arith.subf %14, %15 : f32
    %17 = vector.broadcast %13 : f32 to vector<8x256xf32>
    %18 = arith.subf %3, %17 : vector<8x256xf32>
    %cst_9 = arith.constant 9.99999974E-6 : f32
    %19 = arith.addf %16, %cst_9 : f32
    %20 = math.rsqrt %19 : f32
    %21 = vector.broadcast %20 : f32 to vector<8x256xf32>
    %22 = arith.mulf %18, %21 : vector<8x256xf32>
    %23 = arith.mulf %22, %0 : vector<8x256xf32>
    %24 = arith.addf %23, %1 : vector<8x256xf32>
    %c17_i32 = arith.constant 17 : i32
    %25 = tpu.dynamic_rotate %24 by %c17_i32 dim 1 : vector<8x256xf32>, i32 -> vector<8x256xf32>
    %c0_10 = arith.constant 0 : index
    %c0_11 = arith.constant 0 : index
    %c0_12 = arith.constant 0 : index
    %26 = vector.load %arg4[%c0_10, %c0_11, %c0_12] : memref<9x8x256xf32, #tpu.memory_space<vmem>>, vector<1x8x256xf32>
    %27 = vector.shape_cast %26 : vector<1x8x256xf32> to vector<8x256xf32>
    %28 = arith.mulf %25, %27 : vector<8x256xf32>
    %c16_i32 = arith.constant 16 : i32
    %29 = tpu.dynamic_rotate %24 by %c16_i32 dim 1 : vector<8x256xf32>, i32 -> vector<8x256xf32>
    %c1 = arith.constant 1 : index
    %c0_13 = arith.constant 0 : index
    %c0_14 = arith.constant 0 : index
    %30 = vector.load %arg4[%c1, %c0_13, %c0_14] : memref<9x8x256xf32, #tpu.memory_space<vmem>>, vector<1x8x256xf32>
    %31 = vector.shape_cast %30 : vector<1x8x256xf32> to vector<8x256xf32>
    %32 = arith.mulf %29, %31 : vector<8x256xf32>
    %c15_i32 = arith.constant 15 : i32
    %33 = tpu.dynamic_rotate %24 by %c15_i32 dim 1 : vector<8x256xf32>, i32 -> vector<8x256xf32>
    %c2 = arith.constant 2 : index
    %c0_15 = arith.constant 0 : index
    %c0_16 = arith.constant 0 : index
    %34 = vector.load %arg4[%c2, %c0_15, %c0_16] : memref<9x8x256xf32, #tpu.memory_space<vmem>>, vector<1x8x256xf32>
    %35 = vector.shape_cast %34 : vector<1x8x256xf32> to vector<8x256xf32>
    %36 = arith.mulf %33, %35 : vector<8x256xf32>
    %c1_i32 = arith.constant 1 : i32
    %37 = tpu.dynamic_rotate %24 by %c1_i32 dim 1 : vector<8x256xf32>, i32 -> vector<8x256xf32>
    %c3 = arith.constant 3 : index
    %c0_17 = arith.constant 0 : index
    %c0_18 = arith.constant 0 : index
    %38 = vector.load %arg4[%c3, %c0_17, %c0_18] : memref<9x8x256xf32, #tpu.memory_space<vmem>>, vector<1x8x256xf32>
    %39 = vector.shape_cast %38 : vector<1x8x256xf32> to vector<8x256xf32>
    %40 = arith.mulf %37, %39 : vector<8x256xf32>
    %c255_i32 = arith.constant 255 : i32
    %41 = tpu.dynamic_rotate %24 by %c255_i32 dim 1 : vector<8x256xf32>, i32 -> vector<8x256xf32>
    %c5 = arith.constant 5 : index
    %c0_19 = arith.constant 0 : index
    %c0_20 = arith.constant 0 : index
    %42 = vector.load %arg4[%c5, %c0_19, %c0_20] : memref<9x8x256xf32, #tpu.memory_space<vmem>>, vector<1x8x256xf32>
    %43 = vector.shape_cast %42 : vector<1x8x256xf32> to vector<8x256xf32>
    %44 = arith.mulf %41, %43 : vector<8x256xf32>
    %c241_i32 = arith.constant 241 : i32
    %45 = tpu.dynamic_rotate %24 by %c241_i32 dim 1 : vector<8x256xf32>, i32 -> vector<8x256xf32>
    %c6 = arith.constant 6 : index
    %c0_21 = arith.constant 0 : index
    %c0_22 = arith.constant 0 : index
    %46 = vector.load %arg4[%c6, %c0_21, %c0_22] : memref<9x8x256xf32, #tpu.memory_space<vmem>>, vector<1x8x256xf32>
    %47 = vector.shape_cast %46 : vector<1x8x256xf32> to vector<8x256xf32>
    %48 = arith.mulf %45, %47 : vector<8x256xf32>
    %c240_i32 = arith.constant 240 : i32
    %49 = tpu.dynamic_rotate %24 by %c240_i32 dim 1 : vector<8x256xf32>, i32 -> vector<8x256xf32>
    %c7 = arith.constant 7 : index
    %c0_23 = arith.constant 0 : index
    %c0_24 = arith.constant 0 : index
    %50 = vector.load %arg4[%c7, %c0_23, %c0_24] : memref<9x8x256xf32, #tpu.memory_space<vmem>>, vector<1x8x256xf32>
    %51 = vector.shape_cast %50 : vector<1x8x256xf32> to vector<8x256xf32>
    %52 = arith.mulf %49, %51 : vector<8x256xf32>
    %c239_i32 = arith.constant 239 : i32
    %53 = tpu.dynamic_rotate %24 by %c239_i32 dim 1 : vector<8x256xf32>, i32 -> vector<8x256xf32>
    %c8 = arith.constant 8 : index
    %c0_25 = arith.constant 0 : index
    %c0_26 = arith.constant 0 : index
    %54 = vector.load %arg4[%c8, %c0_25, %c0_26] : memref<9x8x256xf32, #tpu.memory_space<vmem>>, vector<1x8x256xf32>
    %55 = vector.shape_cast %54 : vector<1x8x256xf32> to vector<8x256xf32>
    %56 = arith.mulf %53, %55 : vector<8x256xf32>
    %57 = tpu.concatenate %28, %32, %36, %40, %24, %44, %48, %52, %56 in 0 : vector<8x256xf32>, vector<8x256xf32>, vector<8x256xf32>, vector<8x256xf32>, vector<8x256xf32>, vector<8x256xf32>, vector<8x256xf32>, vector<8x256xf32>, vector<8x256xf32> -> vector<72x256xf32>
    %58 = arith.truncf %57 : vector<72x256xf32> to vector<72x256xbf16>
    %c0_27 = arith.constant 0 : index
    %c0_28 = arith.constant 0 : index
    %59 = vector.load %arg6[%c0_27, %c0_28] : memref<8x72xbf16, #tpu.memory_space<vmem>>, vector<8x72xbf16>
    %cst_29 = arith.constant dense<0.000000e+00> : vector<8x256xf32>
    %60 = tpu.matmul %59, %58, %cst_29 {dimension_numbers = #tpu.dot_dimension_numbers<[1], [0], [0], [1], [0, 0, 1, 1], [], []>} : vector<8x72xbf16>, vector<72x256xbf16>, vector<8x256xf32> -> vector<8x256xf32>
    %c0_30 = arith.constant 0 : index
    %c0_31 = arith.constant 0 : index
    %61 = vector.load %arg7[%c0_30, %c0_31] : memref<8x1xf32, #tpu.memory_space<vmem>>, vector<8x1xf32>
    %62 = vector.broadcast %61 : vector<8x1xf32> to vector<8x256xf32>
    %63 = arith.addf %60, %62 : vector<8x256xf32>
    %cst_32 = arith.constant 0.000000e+00 : f32
    %64 = vector.broadcast %cst_32 : f32 to vector<8x256xf32>
    %65 = arith.maximumf %63, %64 : vector<8x256xf32>
    %c17_i32_33 = arith.constant 17 : i32
    %66 = tpu.dynamic_rotate %65 by %c17_i32_33 dim 1 : vector<8x256xf32>, i32 -> vector<8x256xf32>
    %c0_34 = arith.constant 0 : index
    %c0_35 = arith.constant 0 : index
    %c0_36 = arith.constant 0 : index
    %67 = vector.load %arg5[%c0_34, %c0_35, %c0_36] : memref<9x8x256xf32, #tpu.memory_space<vmem>>, vector<1x8x256xf32>
    %68 = vector.shape_cast %67 : vector<1x8x256xf32> to vector<8x256xf32>
    %69 = arith.mulf %66, %68 : vector<8x256xf32>
    %c16_i32_37 = arith.constant 16 : i32
    %70 = tpu.dynamic_rotate %65 by %c16_i32_37 dim 1 : vector<8x256xf32>, i32 -> vector<8x256xf32>
    %c1_38 = arith.constant 1 : index
    %c0_39 = arith.constant 0 : index
    %c0_40 = arith.constant 0 : index
    %71 = vector.load %arg5[%c1_38, %c0_39, %c0_40] : memref<9x8x256xf32, #tpu.memory_space<vmem>>, vector<1x8x256xf32>
    %72 = vector.shape_cast %71 : vector<1x8x256xf32> to vector<8x256xf32>
    %73 = arith.mulf %70, %72 : vector<8x256xf32>
    %c15_i32_41 = arith.constant 15 : i32
    %74 = tpu.dynamic_rotate %65 by %c15_i32_41 dim 1 : vector<8x256xf32>, i32 -> vector<8x256xf32>
    %c2_42 = arith.constant 2 : index
    %c0_43 = arith.constant 0 : index
    %c0_44 = arith.constant 0 : index
    %75 = vector.load %arg5[%c2_42, %c0_43, %c0_44] : memref<9x8x256xf32, #tpu.memory_space<vmem>>, vector<1x8x256xf32>
    %76 = vector.shape_cast %75 : vector<1x8x256xf32> to vector<8x256xf32>
    %77 = arith.mulf %74, %76 : vector<8x256xf32>
    %c1_i32_45 = arith.constant 1 : i32
    %78 = tpu.dynamic_rotate %65 by %c1_i32_45 dim 1 : vector<8x256xf32>, i32 -> vector<8x256xf32>
    %c3_46 = arith.constant 3 : index
    %c0_47 = arith.constant 0 : index
    %c0_48 = arith.constant 0 : index
    %79 = vector.load %arg5[%c3_46, %c0_47, %c0_48] : memref<9x8x256xf32, #tpu.memory_space<vmem>>, vector<1x8x256xf32>
    %80 = vector.shape_cast %79 : vector<1x8x256xf32> to vector<8x256xf32>
    %81 = arith.mulf %78, %80 : vector<8x256xf32>
    %c255_i32_49 = arith.constant 255 : i32
    %82 = tpu.dynamic_rotate %65 by %c255_i32_49 dim 1 : vector<8x256xf32>, i32 -> vector<8x256xf32>
    %c5_50 = arith.constant 5 : index
    %c0_51 = arith.constant 0 : index
    %c0_52 = arith.constant 0 : index
    %83 = vector.load %arg5[%c5_50, %c0_51, %c0_52] : memref<9x8x256xf32, #tpu.memory_space<vmem>>, vector<1x8x256xf32>
    %84 = vector.shape_cast %83 : vector<1x8x256xf32> to vector<8x256xf32>
    %85 = arith.mulf %82, %84 : vector<8x256xf32>
    %c241_i32_53 = arith.constant 241 : i32
    %86 = tpu.dynamic_rotate %65 by %c241_i32_53 dim 1 : vector<8x256xf32>, i32 -> vector<8x256xf32>
    %c6_54 = arith.constant 6 : index
    %c0_55 = arith.constant 0 : index
    %c0_56 = arith.constant 0 : index
    %87 = vector.load %arg5[%c6_54, %c0_55, %c0_56] : memref<9x8x256xf32, #tpu.memory_space<vmem>>, vector<1x8x256xf32>
    %88 = vector.shape_cast %87 : vector<1x8x256xf32> to vector<8x256xf32>
    %89 = arith.mulf %86, %88 : vector<8x256xf32>
    %c240_i32_57 = arith.constant 240 : i32
    %90 = tpu.dynamic_rotate %65 by %c240_i32_57 dim 1 : vector<8x256xf32>, i32 -> vector<8x256xf32>
    %c7_58 = arith.constant 7 : index
    %c0_59 = arith.constant 0 : index
    %c0_60 = arith.constant 0 : index
    %91 = vector.load %arg5[%c7_58, %c0_59, %c0_60] : memref<9x8x256xf32, #tpu.memory_space<vmem>>, vector<1x8x256xf32>
    %92 = vector.shape_cast %91 : vector<1x8x256xf32> to vector<8x256xf32>
    %93 = arith.mulf %90, %92 : vector<8x256xf32>
    %c239_i32_61 = arith.constant 239 : i32
    %94 = tpu.dynamic_rotate %65 by %c239_i32_61 dim 1 : vector<8x256xf32>, i32 -> vector<8x256xf32>
    %c8_62 = arith.constant 8 : index
    %c0_63 = arith.constant 0 : index
    %c0_64 = arith.constant 0 : index
    %95 = vector.load %arg5[%c8_62, %c0_63, %c0_64] : memref<9x8x256xf32, #tpu.memory_space<vmem>>, vector<1x8x256xf32>
    %96 = vector.shape_cast %95 : vector<1x8x256xf32> to vector<8x256xf32>
    %97 = arith.mulf %94, %96 : vector<8x256xf32>
    %98 = tpu.concatenate %69, %73, %77, %81, %65, %85, %89, %93, %97, %3 in 0 : vector<8x256xf32>, vector<8x256xf32>, vector<8x256xf32>, vector<8x256xf32>, vector<8x256xf32>, vector<8x256xf32>, vector<8x256xf32>, vector<8x256xf32>, vector<8x256xf32>, vector<8x256xf32> -> vector<80x256xf32>
    %99 = arith.truncf %98 : vector<80x256xf32> to vector<80x256xbf16>
    %c0_65 = arith.constant 0 : index
    %c0_66 = arith.constant 0 : index
    %100 = vector.load %arg8[%c0_65, %c0_66] : memref<8x80xbf16, #tpu.memory_space<vmem>>, vector<8x80xbf16>
    %cst_67 = arith.constant dense<0.000000e+00> : vector<8x256xf32>
    %101 = tpu.matmul %100, %99, %cst_67 {dimension_numbers = #tpu.dot_dimension_numbers<[1], [0], [0], [1], [0, 0, 1, 1], [], []>} : vector<8x80xbf16>, vector<80x256xbf16>, vector<8x256xf32> -> vector<8x256xf32>
    %c0_68 = arith.constant 0 : index
    %c0_69 = arith.constant 0 : index
    %102 = vector.load %arg9[%c0_68, %c0_69] : memref<8x1xf32, #tpu.memory_space<vmem>>, vector<8x1xf32>
    %103 = vector.broadcast %102 : vector<8x1xf32> to vector<8x256xf32>
    %104 = arith.addf %101, %103 : vector<8x256xf32>
    %cst_70 = arith.constant 0.000000e+00 : f32
    %105 = vector.broadcast %cst_70 : f32 to vector<8x256xf32>
    %106 = arith.maximumf %104, %105 : vector<8x256xf32>
    %c0_71 = arith.constant 0 : index
    %c0_72 = arith.constant 0 : index
    %c0_73 = arith.constant 0 : index
    %107 = vector.load %arg10[%c0_71, %c0_72, %c0_73] : memref<1x8x256xf32, #tpu.memory_space<vmem>>, vector<1x8x256xf32>
    %108 = vector.shape_cast %107 : vector<1x8x256xf32> to vector<8x256xf32>
    %109 = vector.shape_cast %106 : vector<8x256xf32> to vector<1x8x256xf32>
    tpu.vector_store %arg10[%c0_71, %c0_72, %c0_73], %109 {strides = array<i32>} : memref<1x8x256xf32, #tpu.memory_space<vmem>>, vector<1x8x256xf32>,
    return
  }
  func.func @transform_0(%arg0: i32) -> (i32, i32, i32) {
    %c0_i32 = arith.constant 0 : i32
    %c0_i32_0 = arith.constant 0 : i32
    %c0_i32_1 = arith.constant 0 : i32
    return %arg0, %c0_i32, %c0_i32_0 : i32, i32, i32
  }
  func.func @transform_1(%arg0: i32) -> (i32, i32) {
    %c0_i32 = arith.constant 0 : i32
    %c0_i32_0 = arith.constant 0 : i32
    %c0_i32_1 = arith.constant 0 : i32
    return %c0_i32, %c0_i32_0 : i32, i32
  }
  func.func @transform_2(%arg0: i32) -> (i32, i32) {
    %c0_i32 = arith.constant 0 : i32
    %c0_i32_0 = arith.constant 0 : i32
    %c0_i32_1 = arith.constant 0 : i32
    return %c0_i32, %c0_i32_0 : i32, i32
  }
  func.func @transform_3(%arg0: i32) -> (i32, i32, i32) {
    %c0_i32 = arith.constant 0 : i32
    %c0_i32_0 = arith.constant 0 : i32
    %c0_i32_1 = arith.constant 0 : i32
    %c0_i32_2 = arith.constant 0 : i32
    return %c0_i32, %c0_i32_0, %c0_i32_1 : i32, i32, i32
  }
  func.func @transform_4(%arg0: i32) -> (i32, i32, i32) {
    %c0_i32 = arith.constant 0 : i32
    %c0_i32_0 = arith.constant 0 : i32
    %c0_i32_1 = arith.constant 0 : i32
    %c0_i32_2 = arith.constant 0 : i32
    return %c0_i32, %c0_i32_0, %c0_i32_1 : i32, i32, i32
  }
  func.func @transform_5(%arg0: i32) -> (i32, i32) {
    %c0_i32 = arith.constant 0 : i32
    %c0_i32_0 = arith.constant 0 : i32
    %c0_i32_1 = arith.constant 0 : i32
    return %c0_i32, %c0_i32_0 : i32, i32
  }
  func.func @transform_6(%arg0: i32) -> (i32, i32) {
    %c0_i32 = arith.constant 0 : i32
    %c0_i32_0 = arith.constant 0 : i32
    %c0_i32_1 = arith.constant 0 : i32
    return %c0_i32, %c0_i32_0 : i32, i32
  }
  func.func @transform_7(%arg0: i32) -> (i32, i32) {
    %c0_i32 = arith.constant 0 : i32
    %c0_i32_0 = arith.constant 0 : i32
    %c0_i32_1 = arith.constant 0 : i32
    return %c0_i32, %c0_i32_0 : i32, i32
  }
  func.func @transform_8(%arg0: i32) -> (i32, i32) {
    %c0_i32 = arith.constant 0 : i32
    %c0_i32_0 = arith.constant 0 : i32
    %c0_i32_1 = arith.constant 0 : i32
    return %c0_i32, %c0_i32_0 : i32, i32
  }
  func.func @transform_9(%arg0: i32) -> (i32, i32, i32) {
    %c0_i32 = arith.constant 0 : i32
    %c0_i32_0 = arith.constant 0 : i32
    %c0_i32_1 = arith.constant 0 : i32
    return %arg0, %c0_i32, %c0_i32_0 : i32, i32, i32
  }
}

</mosaic_0001>

<llo_original>
// kernel: tpu_custom_call.1
$region0: #{tpu_custom_call.1}
  #allocation0 [shape = 'u32[]', space=smem, size = 0x4, offset = 0x4, fixed_abs, tag = 'smem constant byte address 0x4 - core index']
  #allocation1 [shape = 'u32[144,128]{1,0:T(1,128)}', space=vmem, size = 0x12000, scoped, tag = 'internal scratch']
  %s0 = inlined_call_operand.hbm [shape: f32[2,8,256], index: 0, kind: input, shape index: {}]
  %s1 = inlined_call_operand.vmem [shape: f32[8,256], index: 1, kind: input, shape index: {}]
  %s2 = inlined_call_operand.hbm [shape: f32[8,256], index: 2, kind: input, shape index: {}]
  %s3 = inlined_call_operand.hbm [shape: f32[9,8,256], index: 3, kind: input, shape index: {}]
  %s4 = inlined_call_operand.hbm [shape: f32[9,8,256], index: 4, kind: input, shape index: {}]
  %s5 = inlined_call_operand.vmem [shape: bf16[8,72], index: 5, kind: input, shape index: {}]
  %s6 = inlined_call_operand.vmem [shape: f32[8,1], index: 6, kind: input, shape index: {}]
  %s7 = inlined_call_operand.vmem [shape: bf16[8,80], index: 7, kind: input, shape index: {}]
  %s8 = inlined_call_operand.vmem [shape: f32[8,1], index: 8, kind: input, shape index: {}]
  %s9 = inlined_call_operand.hbm [shape: f32[2,8,256], index: 9, kind: output, shape index: {}]
  %s10 = sld [smem:[#allocation0]]
  $region85: #{tpu_custom_call.1} parent=0
    _
  %s12 = ssub.s32 1, %s10
  %s13 = scalar_select 0, %s12, %s10
  $region1: #{tpu_custom_call.1} parent=0
    #allocation2 [shape = 'u8[16384]{0}', space=vmem, size = 0x4000, scoped, tag = 'input window, operand 0']
    #allocation3 [shape = 's32[2]{0}', space=sflag, size = 0x8, scoped, tag = 'scoped memory for tpu_custom_call.1']
    #allocation4 [shape = 's32[2]{0}', space=sflag, size = 0x8, scoped, tag = 'scoped memory for tpu_custom_call.1']
    #allocation5 [shape = 'u8[8192]{0}', space=vmem, size = 0x2000, scoped, tag = 'input window, operand 2, single buffered']
    #allocation6 [shape = 's32[1]{0}', space=sflag, size = 0x4, scoped, tag = 'scoped memory for tpu_custom_call.1']
    #allocation7 [shape = 'u8[73728]{0}', space=vmem, size = 0x12000, scoped, tag = 'input window, operand 3, single buffered']
    #allocation8 [shape = 'u8[73728]{0}', space=vmem, size = 0x12000, scoped, tag = 'input window, operand 4, single buffered']
    #allocation9 [shape = 's32[1]{0}', space=sflag, size = 0x4, scoped, tag = 'scoped memory for tpu_custom_call.1']
    #allocation10 [shape = 'u8[16384]{0}', space=vmem, size = 0x4000, scoped, tag = 'output window, operand 0']
    %14 = vsyncpa [#allocation3], 0
    %s15 = scalar_lea.sflag [#allocation3], 1
    %16 = vsyncpa %s15, 0
    %17 = vsyncpa [#allocation6], 0
    %18 = vsyncpa [#allocation9], 0
    %19 = vsyncpa [#allocation4], 0
    %s20 = scalar_lea.sflag [#allocation4], 1
    %21 = vsyncpa %s20, 0
    loop: start=0, step=1, limit=4
    $region2: #{tpu_custom_call.1} parent=1 // loop_pre_header
      _
    $region3: #{tpu_custom_call.1} parent=1 // loop_header
      %s23 = sphi 0, %s27
      %p24 = scmp.ge.s32.totalorder %s23, 4
      %s33 = sphi 0, %s35
      %s36 = sphi 0, %s33
      %s37 = sphi 0, %s36
      %s53 = sphi 0, %s37
      %s57 = sphi 0, %s57
      %s59 = sphi 0, %s57
      %s60 = sphi 0, %s59
      %s74 = sphi 0, %s60
      %s78 = sphi 0, %s78
      %s80 = sphi 0, %s78
      %s81 = sphi 0, %s80
      %s95 = sphi 0, %s81
      %s99 = sphi 0, %s99
      %s101 = sphi 0, %s99
      %s102 = sphi 0, %s101
      %s116 = sphi 0, %s102
      %s120 = sphi 0, %s120
      %s122 = sphi 0, %s120
      %s123 = sphi 0, %s122
      %s137 = sphi 0, %s123
      %s141 = sphi 0, %s141
      %s143 = sphi 0, %s141
      %s144 = sphi 0, %s143
      %s158 = sphi 0, %s144
      %s162 = sphi 0, %s162
      %s164 = sphi 0, %s162
      %s165 = sphi 0, %s164
      %s179 = sphi 0, %s165
      %s183 = sphi 0, %s183
      %s185 = sphi 0, %s183
      %s186 = sphi 0, %s185
      %s200 = sphi 0, %s186
      %s204 = sphi 0, %s204
      %s206 = sphi 0, %s204
      %s207 = sphi 0, %s206
      %s221 = sphi 0, %s207
      %s227 = sphi 0, %s229
      %s230 = sphi 0, %s227
      %s231 = sphi 0, %s230
      %s247 = sphi 0, %s231
    $region4: #{tpu_custom_call.1} parent=1 // loop_header_branch
      %26 = sbr.rel (%p24) target = $region8
    $region5: #{tpu_custom_call.1} parent=1 // loop_body
      %s28 = ssub.s32 %s23, 1
      %s29 = ssub.s32 %s23, 2
      %s30 = sadd.s32 %s23, 1
      %s31 = ssub.s32 %s23, %s30
      %p32 = scmp.eq.s32.totalorder %s31, 0
      %s34 = sadd.s32 %s33, 1
      %s35 = scalar_select %p32, %s33, %s34
      %p38 = pneg %p32
      %p39 = scmp.eq.s32.totalorder %s23, 1
      %p40 = por %p38, %p39
      %p41 = scmp.ne.s32.totalorder %s33, %s36
      %p42 = scmp.eq.s32.totalorder %s23, 0
      %p43 = por %p41, %p42
      %p44 = scmp.ne.s32.totalorder %s33, %s36
      %p45 = scmp.eq.s32.totalorder %s28, 1
      %p46 = por %p44, %p45
      %p47 = scmp.ne.s32.totalorder %s36, %s37
      %p48 = scmp.eq.s32.totalorder %s28, 0
      %p49 = por %p47, %p48
      %p50 = scmp.ne.s32.totalorder %s36, %s37
      %p51 = scmp.eq.s32.totalorder %s29, 1
      %p52 = por %p50, %p51
      %p54 = scmp.ne.s32.totalorder %s37, %s53
      %p55 = scmp.eq.s32.totalorder %s29, 0
      %p56 = por %p54, %p55
      %s58 = sadd.s32 %s57, 1
      %p61 = scmp.eq.s32.totalorder %s23, 1
      %p62 = scmp.ne.s32.totalorder %s57, %s59
      %p63 = scmp.eq.s32.totalorder %s23, 0
      %p64 = por %p62, %p63
      %p65 = scmp.ne.s32.totalorder %s57, %s59
      %p66 = scmp.eq.s32.totalorder %s28, 1
      %p67 = por %p65, %p66
      %p68 = scmp.ne.s32.totalorder %s59, %s60
      %p69 = scmp.eq.s32.totalorder %s28, 0
      %p70 = por %p68, %p69
      %p71 = scmp.ne.s32.totalorder %s59, %s60
      %p72 = scmp.eq.s32.totalorder %s29, 1
      %p73 = por %p71, %p72
      %p75 = scmp.ne.s32.totalorder %s60, %s74
      %p76 = scmp.eq.s32.totalorder %s29, 0
      %p77 = por %p75, %p76
      %s79 = sadd.s32 %s78, 1
      %p82 = scmp.eq.s32.totalorder %s23, 1
      %p83 = scmp.ne.s32.totalorder %s78, %s80
      %p84 = scmp.eq.s32.totalorder %s23, 0
      %p85 = por %p83, %p84
      %p86 = scmp.ne.s32.totalorder %s78, %s80
      %p87 = scmp.eq.s32.totalorder %s28, 1
      %p88 = por %p86, %p87
      %p89 = scmp.ne.s32.totalorder %s80, %s81
      %p90 = scmp.eq.s32.totalorder %s28, 0
      %p91 = por %p89, %p90
      %p92 = scmp.ne.s32.totalorder %s80, %s81
      %p93 = scmp.eq.s32.totalorder %s29, 1
      %p94 = por %p92, %p93
      %p96 = scmp.ne.s32.totalorder %s81, %s95
      %p97 = scmp.eq.s32.totalorder %s29, 0
      %p98 = por %p96, %p97
      %s100 = sadd.s32 %s99, 1
      %p103 = scmp.eq.s32.totalorder %s23, 1
      %p104 = scmp.ne.s32.totalorder %s99, %s101
      %p105 = scmp.eq.s32.totalorder %s23, 0
      %p106 = por %p104, %p105
      %p107 = scmp.ne.s32.totalorder %s99, %s101
      %p108 = scmp.eq.s32.totalorder %s28, 1
      %p109 = por %p107, %p108
      %p110 = scmp.ne.s32.totalorder %s101, %s102
      %p111 = scmp.eq.s32.totalorder %s28, 0
      %p112 = por %p110, %p111
      %p113 = scmp.ne.s32.totalorder %s101, %s102
      %p114 = scmp.eq.s32.totalorder %s29, 1
      %p115 = por %p113, %p114
      %p117 = scmp.ne.s32.totalorder %s102, %s116
      %p118 = scmp.eq.s32.totalorder %s29, 0
      %p119 = por %p117, %p118
      %s121 = sadd.s32 %s120, 1
      %p124 = scmp.eq.s32.totalorder %s23, 1
      %p125 = scmp.ne.s32.totalorder %s120, %s122
      %p126 = scmp.eq.s32.totalorder %s23, 0
      %p127 = por %p125, %p126
      %p128 = scmp.ne.s32.totalorder %s120, %s122
      %p129 = scmp.eq.s32.totalorder %s28, 1
      %p130 = por %p128, %p129
      %p131 = scmp.ne.s32.totalorder %s122, %s123
      %p132 = scmp.eq.s32.totalorder %s28, 0
      %p133 = por %p131, %p132
      %p134 = scmp.ne.s32.totalorder %s122, %s123
      %p135 = scmp.eq.s32.totalorder %s29, 1
      %p136 = por %p134, %p135
      %p138 = scmp.ne.s32.totalorder %s123, %s137
      %p139 = scmp.eq.s32.totalorder %s29, 0
      %p140 = por %p138, %p139
      %s142 = sadd.s32 %s141, 1
      %p145 = scmp.eq.s32.totalorder %s23, 1
      %p146 = scmp.ne.s32.totalorder %s141, %s143
      %p147 = scmp.eq.s32.totalorder %s23, 0
      %p148 = por %p146, %p147
      %p149 = scmp.ne.s32.totalorder %s141, %s143
      %p150 = scmp.eq.s32.totalorder %s28, 1
      %p151 = por %p149, %p150
      %p152 = scmp.ne.s32.totalorder %s143, %s144
      %p153 = scmp.eq.s32.totalorder %s28, 0
      %p154 = por %p152, %p153
      %p155 = scmp.ne.s32.totalorder %s143, %s144
      %p156 = scmp.eq.s32.totalorder %s29, 1
      %p157 = por %p155, %p156
      %p159 = scmp.ne.s32.totalorder %s144, %s158
      %p160 = scmp.eq.s32.totalorder %s29, 0
      %p161 = por %p159, %p160
      %s163 = sadd.s32 %s162, 1
      %p166 = scmp.eq.s32.totalorder %s23, 1
      %p167 = scmp.ne.s32.totalorder %s162, %s164
      %p168 = scmp.eq.s32.totalorder %s23, 0
      %p169 = por %p167, %p168
      %p170 = scmp.ne.s32.totalorder %s162, %s164
      %p171 = scmp.eq.s32.totalorder %s28, 1
      %p172 = por %p170, %p171
      %p173 = scmp.ne.s32.totalorder %s164, %s165
      %p174 = scmp.eq.s32.totalorder %s28, 0
      %p175 = por %p173, %p174
      %p176 = scmp.ne.s32.totalorder %s164, %s165
      %p177 = scmp.eq.s32.totalorder %s29, 1
      %p178 = por %p176, %p177
      %p180 = scmp.ne.s32.totalorder %s165, %s179
      %p181 = scmp.eq.s32.totalorder %s29, 0
      %p182 = por %p180, %p181
      %s184 = sadd.s32 %s183, 1
      %p187 = scmp.eq.s32.totalorder %s23, 1
      %p188 = scmp.ne.s32.totalorder %s183, %s185
      %p189 = scmp.eq.s32.totalorder %s23, 0
      %p190 = por %p188, %p189
      %p191 = scmp.ne.s32.totalorder %s183, %s185
      %p192 = scmp.eq.s32.totalorder %s28, 1
      %p193 = por %p191, %p192
      %p194 = scmp.ne.s32.totalorder %s185, %s186
      %p195 = scmp.eq.s32.totalorder %s28, 0
      %p196 = por %p194, %p195
      %p197 = scmp.ne.s32.totalorder %s185, %s186
      %p198 = scmp.eq.s32.totalorder %s29, 1
      %p199 = por %p197, %p198
      %p201 = scmp.ne.s32.totalorder %s186, %s200
      %p202 = scmp.eq.s32.totalorder %s29, 0
      %p203 = por %p201, %p202
      %s205 = sadd.s32 %s204, 1
      %p208 = scmp.eq.s32.totalorder %s23, 1
      %p209 = scmp.ne.s32.totalorder %s204, %s206
      %p210 = scmp.eq.s32.totalorder %s23, 0
      %p211 = por %p209, %p210
      %p212 = scmp.ne.s32.totalorder %s204, %s206
      %p213 = scmp.eq.s32.totalorder %s28, 1
      %p214 = por %p212, %p213
      %p215 = scmp.ne.s32.totalorder %s206, %s207
      %p216 = scmp.eq.s32.totalorder %s28, 0
      %p217 = por %p215, %p216
      %p218 = scmp.ne.s32.totalorder %s206, %s207
      %p219 = scmp.eq.s32.totalorder %s29, 1
      %p220 = por %p218, %p219
      %p222 = scmp.ne.s32.totalorder %s207, %s221
      %p223 = scmp.eq.s32.totalorder %s29, 0
      %p224 = por %p222, %p223
      %s225 = ssub.s32 %s23, %s30
      %p226 = scmp.eq.s32.totalorder %s225, 0
      %s228 = sadd.s32 %s227, 1
      %s229 = scalar_select %p226, %s227, %s228
      %p232 = pneg %p226
      %p233 = scmp.eq.s32.totalorder %s23, 1
      %p234 = por %p232, %p233
      %p235 = scmp.ne.s32.totalorder %s227, %s230
      %p236 = scmp.eq.s32.totalorder %s23, 0
      %p237 = por %p235, %p236
      %p238 = scmp.ne.s32.totalorder %s227, %s230
      %p239 = scmp.eq.s32.totalorder %s28, 1
      %p240 = por %p238, %p239
      %p241 = scmp.ne.s32.totalorder %s230, %s231
      %p242 = scmp.eq.s32.totalorder %s28, 0
      %p243 = por %p241, %p242
      %p244 = scmp.ne.s32.totalorder %s230, %s231
      %p245 = scmp.eq.s32.totalorder %s29, 1
      %p246 = por %p244, %p245
      %p248 = scmp.ne.s32.totalorder %s231, %s247
      %p249 = scmp.eq.s32.totalorder %s29, 0
      %p250 = por %p248, %p249
      %p251 = scmp.le.s32.totalorder 1, %s23
      %p252 = scmp.lt.s32.totalorder %s23, 3
      %p253 = pnand %p251, %p252
      %p254 = pneg %p253
      // Predicated region
      $region9: #{tpu_custom_call.1} parent=5 // pred_check
        _
      $region10: #{tpu_custom_call.1} parent=5 // pred_check_branch
        %256 = sbr.rel (%p253) target = $region12
      $region11: #{tpu_custom_call.1} parent=5 // pred_region
        %s257 = ssub.s32 %s23, 1
        // Predicated region
        $region13: #{tpu_custom_call.1} parent=11 // pred_check
          %p258 = pneg %p70
        $region14: #{tpu_custom_call.1} parent=11 // pred_check_branch
          %260 = sbr.rel (%p258) target = $region16
        $region15: #{tpu_custom_call.1} parent=11 // pred_region
          _
        $region16: #{tpu_custom_call.1} parent=11 // pred_fallthru
          _
        // Predicated region
        $region17: #{tpu_custom_call.1} parent=11 // pred_check
          %p261 = pneg %p91
        $region18: #{tpu_custom_call.1} parent=11 // pred_check_branch
          %263 = sbr.rel (%p261) target = $region20
        $region19: #{tpu_custom_call.1} parent=11 // pred_region
          %s265 = ssub.s32 256, 256
          %266 = vsyncadd [#allocation6], %s265
          %s268 = sshll.u32 [#allocation5], 4
          %s269 = int_to_ptr.vmem [resolvable:$true] %s268
          %271 = dma.hbm_to_vmem [thread:$0]  %s2, 256, %s269, [#allocation6]
        $region20: #{tpu_custom_call.1} parent=11 // pred_fallthru
          _
        // Predicated region
        $region21: #{tpu_custom_call.1} parent=11 // pred_check
          %p272 = pneg %p112
        $region22: #{tpu_custom_call.1} parent=11 // pred_check_branch
          %274 = sbr.rel (%p272) target = $region24
        $region23: #{tpu_custom_call.1} parent=11 // pred_region
          %s276 = ssub.s32 2304, 2304
          %277 = vsyncadd [#allocation6], %s276
          %s278 = sshll.u32 [#allocation7], 4
          %s279 = int_to_ptr.vmem [resolvable:$true] %s278
          %284 = dma.hbm_to_vmem [thread:$0]  %s3, 2304, %s279, [#allocation6], 256, 256, 16
        $region24: #{tpu_custom_call.1} parent=11 // pred_fallthru
          _
        // Predicated region
        $region25: #{tpu_custom_call.1} parent=11 // pred_check
          %p285 = pneg %p133
        $region26: #{tpu_custom_call.1} parent=11 // pred_check_branch
          %287 = sbr.rel (%p285) target = $region28
        $region27: #{tpu_custom_call.1} parent=11 // pred_region
          %s289 = ssub.s32 2304, 2304
          %290 = vsyncadd [#allocation9], %s289
          %s291 = sshll.u32 [#allocation8], 4
          %s292 = int_to_ptr.vmem [resolvable:$true] %s291
          %297 = dma.hbm_to_vmem [thread:$0]  %s4, 2304, %s292, [#allocation9], 256, 256, 16
        $region28: #{tpu_custom_call.1} parent=11 // pred_fallthru
          _
        // Predicated region
        $region29: #{tpu_custom_call.1} parent=11 // pred_check
          %p298 = pneg %p154
        $region30: #{tpu_custom_call.1} parent=11 // pred_check_branch
          %300 = sbr.rel (%p298) target = $region32
        $region31: #{tpu_custom_call.1} parent=11 // pred_region
          _
        $region32: #{tpu_custom_call.1} parent=11 // pred_fallthru
          _
        // Predicated region
        $region33: #{tpu_custom_call.1} parent=11 // pred_check
          %p301 = pneg %p175
        $region34: #{tpu_custom_call.1} parent=11 // pred_check_branch
          %303 = sbr.rel (%p301) target = $region36
        $region35: #{tpu_custom_call.1} parent=11 // pred_region
          _
        $region36: #{tpu_custom_call.1} parent=11 // pred_fallthru
          _
        // Predicated region
        $region37: #{tpu_custom_call.1} parent=11 // pred_check
          %p304 = pneg %p196
        $region38: #{tpu_custom_call.1} parent=11 // pred_check_branch
          %306 = sbr.rel (%p304) target = $region40
        $region39: #{tpu_custom_call.1} parent=11 // pred_region
          _
        $region40: #{tpu_custom_call.1} parent=11 // pred_fallthru
          _
        // Predicated region
        $region41: #{tpu_custom_call.1} parent=11 // pred_check
          %p307 = pneg %p217
        $region42: #{tpu_custom_call.1} parent=11 // pred_check_branch
          %309 = sbr.rel (%p307) target = $region44
        $region43: #{tpu_custom_call.1} parent=11 // pred_region
          _
        $region44: #{tpu_custom_call.1} parent=11 // pred_fallthru
          _
      $region12: #{tpu_custom_call.1} parent=5 // pred_fallthru
        _
      %p310 = scmp.lt.s32.totalorder %s23, 2
      // Predicated region
      $region45: #{tpu_custom_call.1} parent=5 // pred_check
        %p311 = pneg %p310
      $region46: #{tpu_custom_call.1} parent=5 // pred_check_branch
        %313 = sbr.rel (%p311) target = $region48
      $region47: #{tpu_custom_call.1} parent=5 // pred_region
        // Predicated region
        $region49: #{tpu_custom_call.1} parent=47 // pred_check
          %p314 = pneg %p43
        $region50: #{tpu_custom_call.1} parent=47 // pred_check_branch
          %316 = sbr.rel (%p314) target = $region52
        $region51: #{tpu_custom_call.1} parent=47 // pred_region
          %s317 = sand.u32 %s33, 1
          %s318 = scalar_lea.sflag [#allocation3], %s317
          %s319 = sand.u32 %s33, 1
          %s320 = smul.addr %s319, 16
          %s321 = scalar_lea.vmem [#allocation2], %s320
          %s323 = ssub.s32 256, 256
          %324 = vsyncadd %s318, %s323
          %s325 = smul.addr %s23, 2
          %s326 = smul.addr %s325, 128
          %s327 = scalar_lea.hbm %s0, %s326
          %s329 = sshll.u32 %s321, 4
          %s330 = int_to_ptr.vmem [resolvable:$true] %s329
          %332 = dma.hbm_to_vmem [thread:$0]  %s327, 256, %s330, %s318
        $region52: #{tpu_custom_call.1} parent=47 // pred_fallthru
          _
      $region48: #{tpu_custom_call.1} parent=5 // pred_fallthru
        _
      %p333 = scmp.le.s32.totalorder 1, %s23
      %p334 = scmp.lt.s32.totalorder %s23, 3
      %p335 = pnand %p333, %p334
      %p336 = pneg %p335
      // Predicated region
      $region53: #{tpu_custom_call.1} parent=5 // pred_check
        _
      $region54: #{tpu_custom_call.1} parent=5 // pred_check_branch
        %338 = sbr.rel (%p335) target = $region56
      $region55: #{tpu_custom_call.1} parent=5 // pred_region
        %s339 = ssub.s32 %s23, 1
        %s340 = sand.u32 %s36, 1
        %s341 = scalar_lea.sflag [#allocation3], %s340
        %s342 = sand.u32 %s36, 1
        %s343 = smul.addr %s342, 16
        %s344 = scalar_lea.vmem [#allocation2], %s343
        // Predicated region
        $region57: #{tpu_custom_call.1} parent=55 // pred_check
          %p345 = pneg %p49
        $region58: #{tpu_custom_call.1} parent=55 // pred_check_branch
          %347 = sbr.rel (%p345) target = $region60
        $region59: #{tpu_custom_call.1} parent=55 // pred_region
          %348 = dma.done %s341, 256
        $region60: #{tpu_custom_call.1} parent=55 // pred_fallthru
          _
        // Predicated region
        $region61: #{tpu_custom_call.1} parent=55 // pred_check
          %p349 = pneg %p91
        $region62: #{tpu_custom_call.1} parent=55 // pred_check_branch
          %351 = sbr.rel (%p349) target = $region64
        $region63: #{tpu_custom_call.1} parent=55 // pred_region
          %352 = dma.done [#allocation6], 256
        $region64: #{tpu_custom_call.1} parent=55 // pred_fallthru
          _
        // Predicated region
        $region65: #{tpu_custom_call.1} parent=55 // pred_check
          %p353 = pneg %p112
        $region66: #{tpu_custom_call.1} parent=55 // pred_check_branch
          %355 = sbr.rel (%p353) target = $region68
        $region67: #{tpu_custom_call.1} parent=55 // pred_region
          %356 = dma.done [#allocation6], 2304
        $region68: #{tpu_custom_call.1} parent=55 // pred_fallthru
          _
        // Predicated region
        $region69: #{tpu_custom_call.1} parent=55 // pred_check
          %p357 = pneg %p133
        $region70: #{tpu_custom_call.1} parent=55 // pred_check_branch
          %359 = sbr.rel (%p357) target = $region72
        $region71: #{tpu_custom_call.1} parent=55 // pred_region
          %360 = dma.done [#allocation9], 2304
        $region72: #{tpu_custom_call.1} parent=55 // pred_fallthru
          _
        %s361 = sand.u32 %s36, 1
        %s362 = scalar_lea.sflag [#allocation3], %s361
        %s363 = sand.u32 %s36, 1
        %s364 = smul.addr %s363, 16
        %s365 = scalar_lea.vmem [#allocation2], %s364
        %p366 = pneg %p49
        %p367 = pneg %p46
        %p368 = pneg %p70
        %p369 = pneg %p67
        %p370 = pneg %p91
        %p371 = pneg %p88
        %p372 = pneg %p112
        %p373 = pneg %p109
        %p374 = pneg %p133
        %p375 = pneg %p130
        %p376 = pneg %p154
        %p377 = pneg %p151
        %p378 = pneg %p175
        %p379 = pneg %p172
        %p380 = pneg %p196
        %p381 = pneg %p193
        %p382 = pneg %p217
        %p383 = pneg %p214
        %p384 = pneg %p243
        %p385 = pneg %p240
        %s386 = sand.u32 %s230, 1
        %s387 = scalar_lea.sflag [#allocation4], %s386
        %s388 = sand.u32 %s230, 1
        %s389 = smul.addr %s388, 16
        %s390 = scalar_lea.vmem [#allocation10], %s389
        %v392 = vld [vmem:[%s1] sm:$0xff]
        %v393 = vld [vmem:[%s1 + $0x8] sm:$0xff]
        %v394 = vld [vmem:[#allocation5] sm:$0xff]
        %v395 = vld [vmem:[#allocation5 + $0x8] sm:$0xff]
        %v396 = vld [vmem:[%s344] sm:$0xff]
        %v397 = vld [vmem:[%s344 + $0x8] sm:$0xff]
        %v398 = vadd.f32 %v396, %v397
        %399 = vadd.xlane.f32.xlu0 %v398
        %v400 = vpop.xlane.xlu0 %399
        %v401 = vrot.slane %v400, 4
        %v402 = vadd.f32 %v400, %v401
        %v403 = vrot.slane %v402, 2
        %v404 = vadd.f32 %v402, %v403
        %v405 = vrot.slane %v404, 1
        %v406 = vadd.f32 %v404, %v405
        %s407 = vtos %v406
        %v408 = vmul.f32 %v396, %v396
        %v409 = vmul.f32 %v397, %v397
        %v410 = vadd.f32 %v408, %v409
        %411 = vadd.xlane.f32.xlu0 %v410
        %v412 = vpop.xlane.xlu0 %411
        %v413 = vrot.slane %v412, 4
        %v414 = vadd.f32 %v412, %v413
        %v415 = vrot.slane %v414, 2
        %v416 = vadd.f32 %v414, %v415
        %v417 = vrot.slane %v416, 1
        %v418 = vadd.f32 %v416, %v417
        %s419 = vtos %v418
        %s420 = smul.f32 %s407, 0.0009765625
        %s421 = smul.f32 %s419, 0.0009765625
        %s422 = smul.f32 %s420, %s420
        %s423 = ssub.f32 %s421, %s422
        %v424 = vstv %s420
        %v425 = vsub.f32 %v396, %v424
        %v426 = vsub.f32 %v397, %v424
        %s427 = sadd.f32 %s423, 1e-05
        %v428 = vstv %s427
        %v429 = vrsqrt.pop %v428
        %s430 = vtos %v429
        %v431 = vstv %s430
        %v432 = vmul.f32 %v425, %v431
        %v433 = vmul.f32 %v426, %v431
        %v434 = vmul.f32 %v432, %v392
        %v435 = vmul.f32 %v433, %v393
        %v436 = vadd.f32 %v434, %v394
        %v437 = vadd.f32 %v435, %v395
        %438 = vrot.lane.b32.xlu0 %v436, 17
        %v439 = vpop.permute.xlu0 %438
        %440 = vrot.lane.b32.xlu0 %v437, 17
        %v441 = vpop.permute.xlu0 %440
        %v442 = vlaneseq
        %v443 = vand.u32 %v442, 127
        %vm444 = vcmp.lt.s32.totalorder %v443, 17
        %v445 = vsel %vm444, %v439, %v441
        %v446 = vsel %vm444, %v441, %v439
        %v447 = vld [vmem:[#allocation7] sm:$0xff]
        %v448 = vld [vmem:[#allocation7 + $0x8] sm:$0xff]
        %v449 = vmul.f32 %v446, %v447
        %v450 = vmul.f32 %v445, %v448
        %451 = vrot.lane.b32.xlu0 %v436, 16
        %v452 = vpop.permute.xlu0 %451
        %453 = vrot.lane.b32.xlu0 %v437, 16
        %v454 = vpop.permute.xlu0 %453
        %vm455 = vcmp.lt.s32.totalorder %v443, 16
        %v456 = vsel %vm455, %v452, %v454
        %v457 = vsel %vm455, %v454, %v452
        %s458 = scalar_lea.vmem [#allocation7], 16
        %v459 = vld [vmem:[%s458] sm:$0xff]
        %v460 = vld [vmem:[%s458 + $0x8] sm:$0xff]
        %v461 = vmul.f32 %v457, %v459
        %v462 = vmul.f32 %v456, %v460
        %463 = vrot.lane.b32.xlu0 %v436, 15
        %v464 = vpop.permute.xlu0 %463
        %465 = vrot.lane.b32.xlu0 %v437, 15
        %v466 = vpop.permute.xlu0 %465
        %vm467 = vcmp.lt.s32.totalorder %v443, 15
        %v468 = vsel %vm467, %v464, %v466
        %v469 = vsel %vm467, %v466, %v464
        %s470 = scalar_lea.vmem [#allocation7], 32
        %v471 = vld [vmem:[%s470] sm:$0xff]
        %v472 = vld [vmem:[%s470 + $0x8] sm:$0xff]
        %v473 = vmul.f32 %v469, %v471
        %v474 = vmul.f32 %v468, %v472
        %475 = vrot.lane.b32.xlu0 %v436, 1
        %v476 = vpop.permute.xlu0 %475
        %477 = vrot.lane.b32.xlu0 %v437, 1
        %v478 = vpop.permute.xlu0 %477
        %vm479 = vcmp.lt.s32.totalorder %v443, 1
        %v480 = vsel %vm479, %v476, %v478
        %v481 = vsel %vm479, %v478, %v476
        %s482 = scalar_lea.vmem [#allocation7], 48
        %v483 = vld [vmem:[%s482] sm:$0xff]
        %v484 = vld [vmem:[%s482 + $0x8] sm:$0xff]
        %v485 = vmul.f32 %v481, %v483
        %v486 = vmul.f32 %v480, %v484
        %487 = vrot.lane.b32.xlu0 %v436, 127
        %v488 = vpop.permute.xlu0 %487
        %489 = vrot.lane.b32.xlu0 %v437, 127
        %v490 = vpop.permute.xlu0 %489
        %vm491 = vcmp.lt.s32.totalorder %v443, 127
        %v492 = vsel %vm491, %v488, %v490
        %v493 = vsel %vm491, %v490, %v488
        %s494 = scalar_lea.vmem [#allocation7], 80
        %v495 = vld [vmem:[%s494] sm:$0xff]
        %v496 = vld [vmem:[%s494 + $0x8] sm:$0xff]
        %v497 = vmul.f32 %v492, %v495
        %v498 = vmul.f32 %v493, %v496
        %499 = vrot.lane.b32.xlu0 %v436, 113
        %v500 = vpop.permute.xlu0 %499
        %501 = vrot.lane.b32.xlu0 %v437, 113
        %v502 = vpop.permute.xlu0 %501
        %vm503 = vcmp.lt.s32.totalorder %v443, 113
        %v504 = vsel %vm503, %v500, %v502
        %v505 = vsel %vm503, %v502, %v500
        %s506 = scalar_lea.vmem [#allocation7], 96
        %v507 = vld [vmem:[%s506] sm:$0xff]
        %v508 = vld [vmem:[%s506 + $0x8] sm:$0xff]
        %v509 = vmul.f32 %v504, %v507
        %v510 = vmul.f32 %v505, %v508
        %511 = vrot.lane.b32.xlu0 %v436, 112
        %v512 = vpop.permute.xlu0 %511
        %513 = vrot.lane.b32.xlu0 %v437, 112
        %v514 = vpop.permute.xlu0 %513
        %vm515 = vcmp.lt.s32.totalorder %v443, 112
        %v516 = vsel %vm515, %v512, %v514
        %v517 = vsel %vm515, %v514, %v512
        %s518 = scalar_lea.vmem [#allocation7], 112
        %v519 = vld [vmem:[%s518] sm:$0xff]
        %v520 = vld [vmem:[%s518 + $0x8] sm:$0xff]
        %v521 = vmul.f32 %v516, %v519
        %v522 = vmul.f32 %v517, %v520
        %523 = vrot.lane.b32.xlu0 %v436, 111
        %v524 = vpop.permute.xlu0 %523
        %525 = vrot.lane.b32.xlu0 %v437, 111
        %v526 = vpop.permute.xlu0 %525
        %vm527 = vcmp.lt.s32.totalorder %v443, 111
        %v528 = vsel %vm527, %v524, %v526
        %v529 = vsel %vm527, %v526, %v524
        %s530 = scalar_lea.vmem [#allocation7], 128
        %v531 = vld [vmem:[%s530] sm:$0xff]
        %v532 = vld [vmem:[%s530 + $0x8] sm:$0xff]
        %v533 = vmul.f32 %v528, %v531
        %v534 = vmul.f32 %v529, %v532
        %v535 = vpack.c.bf16 %v461, %v449
        %v536 = vpack.c.bf16 %v462, %v450
        %v537 = vpack.c.bf16 %v485, %v473
        %v538 = vpack.c.bf16 %v486, %v474
        %v539 = vpack.c.bf16 %v497, %v436
        %v540 = vpack.c.bf16 %v498, %v437
        %v541 = vpack.c.bf16 %v521, %v509
        %v542 = vpack.c.bf16 %v522, %v510
        %v543 = vpack.c.bf16 %v533, %v533
        %v544 = vpack.c.bf16 %v534, %v534
        %v545 = vld [vmem:[%s5] sm:$0xf]
        %v546 = vld [vmem:[%s6] sm:$0xff]
        %548 = vset.pattern.permute.xlu0 0
        %549 = vperm.xlu0 %548, %v546
        %v550 = vpop.permute.xlu0 %549
        %vm552 = vcmask 588800
        %v554 = vsel %vm552, %v545, 0
        %vm556 = vcmask 1043456
        %v558 = vsel %vm556, %v543, 0
        %v561 = vsel %vm556, %v544, 0
        %563 = vmatprep.subr.bf16.mxu0 %v536
        %564 = vmatpush1.bf16.msra.mxu0 %v535
        %565 = vmatprep.subr.bf16.mxu0 %v538
        %566 = vmatpush1.bf16.msra.mxu0 %v537
        %567 = vmatprep.subr.bf16.mxu0 %v540
        %568 = vmatpush1.bf16.msra.mxu0 %v539
        %569 = vmatprep.subr.bf16.mxu0 %v542
        %570 = vmatpush1.bf16.msra.mxu0 %v541
        %571 = vmatprep.subr.bf16.mxu0 %v561
        %572 = vmatpush1.bf16.msra.mxu0 %v558
        %573 = vmatprep.subr.bf16.mxu0 0
        %574 = vmatpush1.bf16.msra.mxu0 0
        %575 = vmatprep.subr.bf16.mxu0 0
        %576 = vmatpush1.bf16.msra.mxu0 0
        %577 = vmatprep.subr.bf16.mxu0 0
        %578 = vmatpush1.bf16.msra.mxu0 0
        %579 = vmatprep.subr.bf16.mxu0 0
        %580 = vmatpush1.bf16.msra.mxu0 0
        %581 = vmatprep.subr.bf16.mxu0 0
        %582 = vmatpush1.bf16.msra.mxu0 0
        %583 = vmatprep.subr.bf16.mxu0 0
        %584 = vmatpush1.bf16.msra.mxu0 0
        %585 = vmatprep.subr.bf16.mxu0 0
        %586 = vmatpush1.bf16.msra.mxu0 0
        %587 = vmatprep.subr.bf16.mxu0 0
        %588 = vmatpush1.bf16.msra.mxu0 0
        %589 = vmatprep.subr.bf16.mxu0 0
        %590 = vmatpush1.bf16.msra.mxu0 0
        %591 = vmatprep.subr.bf16.mxu0 0
        %592 = vmatpush1.bf16.msra.mxu0 0
        %593 = vmatprep.subr.bf16.mxu0 0
        %594 = vmatpush1.bf16.msra.mxu0 0
        %595 = vmatprep.mubr.bf16.mxu0 0
        %596 = vmatmul.mubr.bf16.gmra.mrb[0].mxu0 %v554
        %v597 = vpop.f32.mrb[0].mxu0
        %v598 = vadd.f32 %v550, %v597
        %v599 = vpop.f32.mrb[0].mxu0
        %v600 = vadd.f32 %v550, %v599
        %v601 = vpop.f32.mrb[0].mxu0
        %v602 = vpop.f32.mrb[0].mxu0
        %603 = vdwg.mxu0
        %v604 = vmax.f32 %v598, 0.0
        %v605 = vmax.f32 %v600, 0.0
        %606 = vrot.lane.b32.xlu0 %v604, 17
        %v607 = vpop.permute.xlu0 %606
        %608 = vrot.lane.b32.xlu0 %v605, 17
        %v609 = vpop.permute.xlu0 %608
        %v610 = vsel %vm444, %v607, %v609
        %v611 = vsel %vm444, %v609, %v607
        %v612 = vld [vmem:[#allocation8] sm:$0xff]
        %v613 = vld [vmem:[#allocation8 + $0x8] sm:$0xff]
        %v614 = vmul.f32 %v611, %v612
        %v615 = vmul.f32 %v610, %v613
        %616 = vrot.lane.b32.xlu0 %v604, 16
        %v617 = vpop.permute.xlu0 %616
        %618 = vrot.lane.b32.xlu0 %v605, 16
        %v619 = vpop.permute.xlu0 %618
        %v620 = vsel %vm455, %v617, %v619
        %v621 = vsel %vm455, %v619, %v617
        %s622 = scalar_lea.vmem [#allocation8], 16
        %v623 = vld [vmem:[%s622] sm:$0xff]
        %v624 = vld [vmem:[%s622 + $0x8] sm:$0xff]
        %v625 = vmul.f32 %v621, %v623
        %v626 = vmul.f32 %v620, %v624
        %627 = vrot.lane.b32.xlu0 %v604, 15
        %v628 = vpop.permute.xlu0 %627
        %629 = vrot.lane.b32.xlu0 %v605, 15
        %v630 = vpop.permute.xlu0 %629
        %v631 = vsel %vm467, %v628, %v630
        %v632 = vsel %vm467, %v630, %v628
        %s633 = scalar_lea.vmem [#allocation8], 32
        %v634 = vld [vmem:[%s633] sm:$0xff]
        %v635 = vld [vmem:[%s633 + $0x8] sm:$0xff]
        %v636 = vmul.f32 %v632, %v634
        %v637 = vmul.f32 %v631, %v635
        %638 = vrot.lane.b32.xlu0 %v604, 1
        %v639 = vpop.permute.xlu0 %638
        %640 = vrot.lane.b32.xlu0 %v605, 1
        %v641 = vpop.permute.xlu0 %640
        %v642 = vsel %vm479, %v639, %v641
        %v643 = vsel %vm479, %v641, %v639
        %s644 = scalar_lea.vmem [#allocation8], 48
        %v645 = vld [vmem:[%s644] sm:$0xff]
        %v646 = vld [vmem:[%s644 + $0x8] sm:$0xff]
        %v647 = vmul.f32 %v643, %v645
        %v648 = vmul.f32 %v642, %v646
        %649 = vrot.lane.b32.xlu0 %v604, 127
        %v650 = vpop.permute.xlu0 %649
        %651 = vrot.lane.b32.xlu0 %v605, 127
        %v652 = vpop.permute.xlu0 %651
        %v653 = vsel %vm491, %v650, %v652
        %v654 = vsel %vm491, %v652, %v650
        %s655 = scalar_lea.vmem [#allocation8], 80
        %v656 = vld [vmem:[%s655] sm:$0xff]
        %v657 = vld [vmem:[%s655 + $0x8] sm:$0xff]
        %v658 = vmul.f32 %v653, %v656
        %v659 = vmul.f32 %v654, %v657
        %660 = vrot.lane.b32.xlu0 %v604, 113
        %v661 = vpop.permute.xlu0 %660
        %662 = vrot.lane.b32.xlu0 %v605, 113
        %v663 = vpop.permute.xlu0 %662
        %v664 = vsel %vm503, %v661, %v663
        %v665 = vsel %vm503, %v663, %v661
        %s666 = scalar_lea.vmem [#allocation8], 96
        %v667 = vld [vmem:[%s666] sm:$0xff]
        %v668 = vld [vmem:[%s666 + $0x8] sm:$0xff]
        %v669 = vmul.f32 %v664, %v667
        %v670 = vmul.f32 %v665, %v668
        %671 = vrot.lane.b32.xlu0 %v604, 112
        %v672 = vpop.permute.xlu0 %671
        %673 = vrot.lane.b32.xlu0 %v605, 112
        %v674 = vpop.permute.xlu0 %673
        %v675 = vsel %vm515, %v672, %v674
        %v676 = vsel %vm515, %v674, %v672
        %s677 = scalar_lea.vmem [#allocation8], 112
        %v678 = vld [vmem:[%s677] sm:$0xff]
        %v679 = vld [vmem:[%s677 + $0x8] sm:$0xff]
        %v680 = vmul.f32 %v675, %v678
        %v681 = vmul.f32 %v676, %v679
        %682 = vrot.lane.b32.xlu0 %v604, 111
        %v683 = vpop.permute.xlu0 %682
        %684 = vrot.lane.b32.xlu0 %v605, 111
        %v685 = vpop.permute.xlu0 %684
        %v686 = vsel %vm527, %v683, %v685
        %v687 = vsel %vm527, %v685, %v683
        %s688 = scalar_lea.vmem [#allocation8], 128
        %v689 = vld [vmem:[%s688] sm:$0xff]
        %v690 = vld [vmem:[%s688 + $0x8] sm:$0xff]
        %v691 = vmul.f32 %v686, %v689
        %v692 = vmul.f32 %v687, %v690
        %v693 = vpack.c.bf16 %v625, %v614
        %v694 = vpack.c.bf16 %v626, %v615
        %v695 = vpack.c.bf16 %v647, %v636
        %v696 = vpack.c.bf16 %v648, %v637
        %v697 = vpack.c.bf16 %v658, %v604
        %v698 = vpack.c.bf16 %v659, %v605
        %v699 = vpack.c.bf16 %v680, %v669
        %v700 = vpack.c.bf16 %v681, %v670
        %v701 = vpack.c.bf16 %v396, %v691
        %v702 = vpack.c.bf16 %v397, %v692
        %v703 = vld [vmem:[%s7] sm:$0xf]
        %v704 = vld [vmem:[%s8] sm:$0xff]
        %706 = vset.pattern.permute.xlu0 0
        %707 = vperm.xlu0 %706, %v704
        %v708 = vpop.permute.xlu0 %707
        %vm710 = vcmask 654336
        %v712 = vsel %vm710, %v703, 0
        %714 = vmatprep.subr.bf16.mxu0 %v694
        %715 = vmatpush1.bf16.msra.mxu0 %v693
        %716 = vmatprep.subr.bf16.mxu0 %v696
        %717 = vmatpush1.bf16.msra.mxu0 %v695
        %718 = vmatprep.subr.bf16.mxu0 %v698
        %719 = vmatpush1.bf16.msra.mxu0 %v697
        %720 = vmatprep.subr.bf16.mxu0 %v700
        %721 = vmatpush1.bf16.msra.mxu0 %v699
        %722 = vmatprep.subr.bf16.mxu0 %v702
        %723 = vmatpush1.bf16.msra.mxu0 %v701
        %724 = vmatprep.subr.bf16.mxu0 0
        %725 = vmatpush1.bf16.msra.mxu0 0
        %726 = vmatprep.subr.bf16.mxu0 0
        %727 = vmatpush1.bf16.msra.mxu0 0
        %728 = vmatprep.subr.bf16.mxu0 0
        %729 = vmatpush1.bf16.msra.mxu0 0
        %730 = vmatprep.subr.bf16.mxu0 0
        %731 = vmatpush1.bf16.msra.mxu0 0
        %732 = vmatprep.subr.bf16.mxu0 0
        %733 = vmatpush1.bf16.msra.mxu0 0
        %734 = vmatprep.subr.bf16.mxu0 0
        %735 = vmatpush1.bf16.msra.mxu0 0
        %736 = vmatprep.subr.bf16.mxu0 0
        %737 = vmatpush1.bf16.msra.mxu0 0
        %738 = vmatprep.subr.bf16.mxu0 0
        %739 = vmatpush1.bf16.msra.mxu0 0
        %740 = vmatprep.subr.bf16.mxu0 0
        %741 = vmatpush1.bf16.msra.mxu0 0
        %742 = vmatprep.subr.bf16.mxu0 0
        %743 = vmatpush1.bf16.msra.mxu0 0
        %744 = vmatprep.subr.bf16.mxu0 0
        %745 = vmatpush1.bf16.msra.mxu0 0
        %746 = vmatprep.mubr.bf16.mxu0 0
        %747 = vmatmul.mubr.bf16.gmra.mrb[0].mxu0 %v712
        %v748 = vpop.f32.mrb[0].mxu0
        %v749 = vadd.f32 %v708, %v748
        %v750 = vpop.f32.mrb[0].mxu0
        %v751 = vadd.f32 %v708, %v750
        %v752 = vpop.f32.mrb[0].mxu0
        %v753 = vpop.f32.mrb[0].mxu0
        %754 = vdwg.mxu0
        %v755 = vmax.f32 %v749, 0.0
        %v756 = vmax.f32 %v751, 0.0
        %757 = vst [vmem:[%s390] sm:$0xff] %v755
        %758 = vst [vmem:[%s390 + $0x8] sm:$0xff] %v756
        %s759 = sand.u32 %s230, 1
        %s760 = scalar_lea.sflag [#allocation4], %s759
        %s761 = sand.u32 %s230, 1
        %s762 = smul.addr %s761, 16
        %s763 = scalar_lea.vmem [#allocation10], %s762
        // Predicated region
        $region73: #{tpu_custom_call.1} parent=55 // pred_check
          %p764 = pneg %p240
        $region74: #{tpu_custom_call.1} parent=55 // pred_check_branch
          %766 = sbr.rel (%p764) target = $region76
        $region75: #{tpu_custom_call.1} parent=55 // pred_region
          %s768 = ssub.s32 256, 256
          %769 = vsyncadd %s760, %s768
          %s770 = smul.addr %s28, 2
          %s771 = smul.addr %s770, 128
          %s772 = scalar_lea.hbm %s9, %s771
          %s774 = sshll.u32 %s763, 4
          %s775 = int_to_ptr.vmem [resolvable:$true] %s774
          %777 = dma.vmem_to_hbm [thread:$0]  %s775, 256, %s772, %s760
        $region76: #{tpu_custom_call.1} parent=55 // pred_fallthru
          _
      $region56: #{tpu_custom_call.1} parent=5 // pred_fallthru
        _
      %p778 = scmp.le.s32.totalorder 2, %s23
      // Predicated region
      $region77: #{tpu_custom_call.1} parent=5 // pred_check
        %p779 = pneg %p778
      $region78: #{tpu_custom_call.1} parent=5 // pred_check_branch
        %781 = sbr.rel (%p779) target = $region80
      $region79: #{tpu_custom_call.1} parent=5 // pred_region
        %s782 = ssub.s32 %s23, 2
        // Predicated region
        $region81: #{tpu_custom_call.1} parent=79 // pred_check
          %p783 = pneg %p246
        $region82: #{tpu_custom_call.1} parent=79 // pred_check_branch
          %785 = sbr.rel (%p783) target = $region84
        $region83: #{tpu_custom_call.1} parent=79 // pred_region
          %s786 = sand.u32 %s231, 1
          %s787 = scalar_lea.sflag [#allocation4], %s786
          %s788 = sand.u32 %s231, 1
          %s789 = smul.addr %s788, 16
          %s790 = scalar_lea.vmem [#allocation10], %s789
          %791 = dma.done %s787, 256
        $region84: #{tpu_custom_call.1} parent=79 // pred_fallthru
          _
      $region80: #{tpu_custom_call.1} parent=5 // pred_fallthru
        _
    $region6: #{tpu_custom_call.1} parent=1 // loop_footer
      %s27 = sadd.s32 1, %s23
    $region7: #{tpu_custom_call.1} parent=1 // loop_footer_branch
      %22 = sbr.rel target = $region3
    $region8: #{tpu_custom_call.1} parent=1 // loop_exit
      _
    %792 = vsyncpa [#allocation3], 1
    %s793 = scalar_lea.sflag [#allocation3], 1
    %794 = vsyncpa %s793, 1
    %795 = vsyncpa [#allocation6], 1
    %796 = vsyncpa [#allocation9], 1
    %797 = vsyncpa [#allocation4], 1
    %s798 = scalar_lea.sflag [#allocation4], 1
    %799 = vsyncpa %s798, 1

</llo_original>
